<compile_context>
chip_gen: v5e
topology: v5e:2x2
jax: 0.10.0
libtpu: 0.0.40
codegen_flags: <defaults>
</compile_context>

<pallas_src>
import functools

import jax
import jax.numpy as jnp
from jax.experimental import pallas as pl
from jax.experimental.pallas import tpu as pltpu


def _round_up(x, m):
    return ((x + m - 1) // m) * m


def _vmem_capacity_bytes():
    """Best-effort per-core VMEM capacity; conservative 64 MiB fallback."""
    try:
        info = pltpu.get_tpu_info()
        cap = getattr(info, "vmem_capacity_bytes", None)
        if cap:
            return int(cap)
    except Exception:
        pass
    return 64 * 1024 * 1024  # safe on v5e/v6e/v7x


def _bert_self_output_kernel(h_ref, x_ref, wt_ref, p_ref, o_ref, *, eps):
    # h_ref  : (tm, H)  hidden_states tile (native dtype)
    # x_ref  : (tm, H)  residual (input_tensor) tile
    # wt_ref : (H, H)   dense weight, already transposed to (in, out) layout
    # p_ref  : (3, H)   stacked [bias; gamma; beta]

    # Dense: h @ W^T == h @ wt.  Plain ((1,),(0,)) contraction -> straight MXU
    # feed, no per-step weight transpose.  f32 accumulation.
    y = jnp.dot(h_ref[...], wt_ref[...], preferred_element_type=jnp.float32)

    bias = p_ref[0:1, :].astype(jnp.float32)
    gamma = p_ref[1:2, :].astype(jnp.float32)
    beta = p_ref[2:3, :].astype(jnp.float32)

    # Dropout: identity at inference.
    # Residual add + bias.
    y = y + bias + x_ref[...].astype(jnp.float32)

    # LayerNorm over the hidden (lane) axis, single reduction sweep.
    # NOTE: E[y^2] - E[y]^2 can lose precision if |mean| >> std; f32 accumu-
    # lation + the var clamp cover BERT-scale activations.
    inv_h = jnp.float32(1.0 / y.shape[-1])
    s1 = jnp.sum(y, axis=-1, keepdims=True)
    s2 = jnp.sum(y * y, axis=-1, keepdims=True)
    mean = s1 * inv_h
    var = jnp.maximum(s2 * inv_h - mean * mean, 0.0)
    out = (y - mean) * jax.lax.rsqrt(var + eps) * gamma + beta

    o_ref[...] = out.astype(o_ref.dtype)


def bert_self_output(hidden_states, input_tensor, weight, bias, gamma, beta,
                     *, eps=1e-12, row_tile=512, compute_dtype=None):
    """hidden_states, input_tensor: (B, S, H). weight: (H, H) torch (out, in).

    compute_dtype: optionally cast the streamed activations (and output) to a
    narrower dtype (e.g. jnp.bfloat16) to halve HBM traffic on the
    bandwidth-bound generations.  Default None = keep the caller's dtype.
    """
    B, S, H = hidden_states.shape
    M = B * S

    h2 = hidden_states.reshape(M, H)
    x2 = input_tensor.reshape(M, H)
    if compute_dtype is not None:
        h2 = h2.astype(compute_dtype)
        x2 = x2.astype(compute_dtype)

    # One-time transpose to (in, out) layout (tiny vs streamed activations;
    # constant-foldable under jit when the weight is a constant).
    wt = jnp.transpose(weight)

    # Stack bias / gamma / beta into a single (3, H) parameter block.
    params = jnp.stack(
        [bias.reshape(H), gamma.reshape(H), beta.reshape(H)], axis=0)

    # --- Row tiling -------------------------------------------------------
    # Large tiles (default 512) amortize the ~0.35 us per-grid-step overhead
    # and keep the kernel near the HBM roofline on v6e/v7x.  If a single tile
    # would cover the whole problem, split it in two (sublane-aligned) so the
    # "parallel" grid axis has >= 2 steps for v7x megacore sharding.  The
    # ragged last tile is handled by Pallas boundary masking (no jnp.pad).
    row_tile = max(8, (int(row_tile) // 8) * 8)
    if M <= row_tile:
        half = _round_up((M + 1) // 2, 8)
        tm = half if 0 < half < M else M
    else:
        tm = row_tile
    grid_m = pl.cdiv(M, tm)

    kernel = functools.partial(_bert_self_output_kernel, eps=eps)

    act_bytes = h2.dtype.itemsize
    w_bytes = wt.dtype.itemsize

    # VMEM budget: resident single-buffered weight + parameter block,
    # double-buffered input/output streams, f32 epilogue temporaries, with
    # ~1.5x headroom.  Cap at 75% of this chip's VMEM so compiler scratch and
    # the pipeline buffers always fit (v7x: ~48 MiB; v5e/v6e: ~96 MiB).
    vmem_estimate = int(
        H * H * w_bytes                       # resident weight
        + 8 * H * params.dtype.itemsize       # param block (sublane-padded)
        + 2 * 2 * tm * H * act_bytes          # 2 streamed inputs, double-buffered
        + 2 * tm * H * act_bytes              # output, double-buffered
        + 6 * tm * H * 4                      # f32 matmul/LayerNorm temporaries
    )
    vmem_limit = min(max(int(vmem_estimate * 1.5), 32 * 1024 * 1024),
                     int(_vmem_capacity_bytes() * 0.75))

    cost = pl.CostEstimate(
        flops=2 * M * H * H + 10 * M * H,
        transcendentals=M,                     # one rsqrt per row
        bytes_accessed=(3 * M * H * act_bytes + H * H * w_bytes
                        + 3 * H * params.dtype.itemsize),
    )

    # Constant-index blocks (weight / params) never change across the grid ->
    # single-buffer them instead of wasting a second VMEM copy.
    const = pl.Buffered(1)

    out_dtype = h2.dtype

    out2 = pl.pallas_call(
        kernel,
        out_shape=jax.ShapeDtypeStruct((M, H), out_dtype),
        grid_spec=pltpu.PrefetchScalarGridSpec(
            num_scalar_prefetch=0,
            grid=(grid_m,),
            in_specs=[
                pl.BlockSpec((tm, H), lambda i: (i, 0)),   # hidden tile
                pl.BlockSpec((tm, H), lambda i: (i, 0)),   # residual tile
                pl.BlockSpec((H, H), lambda i: (0, 0), pipeline_mode=const),
                pl.BlockSpec((3, H), lambda i: (0, 0), pipeline_mode=const),
            ],
            out_specs=pl.BlockSpec((tm, H), lambda i: (i, 0)),
        ),
        compiler_params=pltpu.CompilerParams(
            dimension_semantics=("parallel",),
            vmem_limit_bytes=vmem_limit,
        ),
        cost_estimate=cost,
    )(h2, x2, wt, params)

    return out2.reshape(B, S, H)


if __name__ == "__main__":
    # Small BERT-like config: batch=2, seq=8, hidden=32
    B, S, H = 2, 8, 32
    eps = 1e-12

    key = jax.random.PRNGKey(0)
    k_h, k_x, k_w, k_b, k_g, k_be = jax.random.split(key, 6)

    hidden_states = jax.random.normal(k_h, (B, S, H), dtype=jnp.float32)
    input_tensor = jax.random.normal(k_x, (B, S, H), dtype=jnp.float32)

    # Deterministic synthetic parameters (nn.Linear(H, H) / LayerNorm(H) shapes)
    weight = jax.random.normal(k_w, (H, H), dtype=jnp.float32) * 0.02  # (out, in)
    bias = jax.random.normal(k_b, (H,), dtype=jnp.float32) * 0.02
    gamma = jnp.ones((H,), dtype=jnp.float32) + 0.1 * jax.random.normal(
        k_g, (H,), dtype=jnp.float32)
    beta = 0.1 * jax.random.normal(k_be, (H,), dtype=jnp.float32)

    out = bert_self_output(hidden_states, input_tensor, weight, bias, gamma,
                           beta, eps=eps)
    out = jax.block_until_ready(out)

    # Pure-JAX reference check
    y_ref = hidden_states @ weight.T + bias + input_tensor
    mean = jnp.mean(y_ref, axis=-1, keepdims=True)
    var = jnp.mean((y_ref - mean) ** 2, axis=-1, keepdims=True)
    ref = (y_ref - mean) / jnp.sqrt(var + eps) * gamma + beta

    assert out.shape == (B, S, H)
    max_err = jnp.max(jnp.abs(out - ref))
    assert jnp.allclose(out, ref, atol=2e-5, rtol=2e-5), (
        f"mismatch vs reference: max abs err {max_err:.3e}")
    print("KERNEL_OK")
</pallas_src>

<mosaic_0001>
module attributes {stable_mosaic.version = 11 : i64} {
  func.func @_bert_self_output_kernel(%arg0: i32, %arg1: memref<8x32xf32, #tpu.memory_space<vmem>>, %arg2: memref<8x32xf32, #tpu.memory_space<vmem>>, %arg3: memref<32x32xf32, #tpu.memory_space<vmem>>, %arg4: memref<3x32xf32, #tpu.memory_space<vmem>>, %arg5: memref<8x32xf32, #tpu.memory_space<vmem>>) attributes {dimension_semantics = [#tpu.dimension_semantics<parallel>], iteration_bounds = array<i64: 2>, scalar_prefetch = 0 : i64, scratch_operands = 0 : i64, tpu.core_type = #tpu.core_type<tc>, window_params = [{transform_indices = @transform_0, window_bounds = array<i64: 8, 32>}, {transform_indices = @transform_1, window_bounds = array<i64: 8, 32>}, {pipeline_mode = #tpu.pipeline_mode<synchronous>, transform_indices = @transform_2, window_bounds = array<i64: 32, 32>}, {pipeline_mode = #tpu.pipeline_mode<synchronous>, transform_indices = @transform_3, window_bounds = array<i64: 3, 32>}, {transform_indices = @transform_4, window_bounds = array<i64: 8, 32>}]} {
    %c0 = arith.constant 0 : index
    %c0_0 = arith.constant 0 : index
    %0 = vector.load %arg1[%c0, %c0_0] : memref<8x32xf32, #tpu.memory_space<vmem>>, vector<8x32xf32>
    %c0_1 = arith.constant 0 : index
    %c0_2 = arith.constant 0 : index
    %1 = vector.load %arg3[%c0_1, %c0_2] : memref<32x32xf32, #tpu.memory_space<vmem>>, vector<32x32xf32>
    %cst = arith.constant dense<0.000000e+00> : vector<8x32xf32>
    %2 = tpu.matmul %0, %1, %cst {dimension_numbers = #tpu.dot_dimension_numbers<[1], [0], [0], [1], [0, 0, 1, 1], [], []>} : vector<8x32xf32>, vector<32x32xf32>, vector<8x32xf32> -> vector<8x32xf32>
    %c0_3 = arith.constant 0 : index
    %c0_4 = arith.constant 0 : index
    %3 = vector.load %arg4[%c0_3, %c0_4] : memref<3x32xf32, #tpu.memory_space<vmem>>, vector<1x32xf32>
    %c1 = arith.constant 1 : index
    %c0_5 = arith.constant 0 : index
    %4 = vector.load %arg4[%c1, %c0_5] : memref<3x32xf32, #tpu.memory_space<vmem>>, vector<1x32xf32>
    %c2 = arith.constant 2 : index
    %c0_6 = arith.constant 0 : index
    %5 = vector.load %arg4[%c2, %c0_6] : memref<3x32xf32, #tpu.memory_space<vmem>>, vector<1x32xf32>
    %6 = vector.broadcast %3 : vector<1x32xf32> to vector<8x32xf32>
    %7 = arith.addf %2, %6 : vector<8x32xf32>
    %c0_7 = arith.constant 0 : index
    %c0_8 = arith.constant 0 : index
    %8 = vector.load %arg2[%c0_7, %c0_8] : memref<8x32xf32, #tpu.memory_space<vmem>>, vector<8x32xf32>
    %9 = arith.addf %7, %8 : vector<8x32xf32>
    %cst_9 = arith.constant dense<0.000000e+00> : vector<8xf32>
    %10 = vector.multi_reduction <add>, %9, %cst_9 [1] : vector<8x32xf32> to vector<8xf32>
    %11 = vector.shape_cast %10 : vector<8xf32> to vector<8x1xf32>
    %12 = arith.mulf %9, %9 : vector<8x32xf32>
    %cst_10 = arith.constant dense<0.000000e+00> : vector<8xf32>
    %13 = vector.multi_reduction <add>, %12, %cst_10 [1] : vector<8x32xf32> to vector<8xf32>
    %14 = vector.shape_cast %13 : vector<8xf32> to vector<8x1xf32>
    %cst_11 = arith.constant 3.125000e-02 : f32
    %15 = vector.broadcast %cst_11 : f32 to vector<8x1xf32>
    %16 = arith.mulf %11, %15 : vector<8x1xf32>
    %cst_12 = arith.constant 3.125000e-02 : f32
    %17 = vector.broadcast %cst_12 : f32 to vector<8x1xf32>
    %18 = arith.mulf %14, %17 : vector<8x1xf32>
    %19 = arith.mulf %16, %16 : vector<8x1xf32>
    %20 = arith.subf %18, %19 : vector<8x1xf32>
    %cst_13 = arith.constant 0.000000e+00 : f32
    %21 = vector.broadcast %cst_13 : f32 to vector<8x1xf32>
    %22 = arith.maximumf %20, %21 : vector<8x1xf32>
    %23 = vector.broadcast %16 : vector<8x1xf32> to vector<8x32xf32>
    %24 = arith.subf %9, %23 : vector<8x32xf32>
    %cst_14 = arith.constant 9.99999996E-13 : f32
    %25 = vector.broadcast %cst_14 : f32 to vector<8x1xf32>
    %26 = arith.addf %22, %25 : vector<8x1xf32>
    %27 = math.rsqrt %26 : vector<8x1xf32>
    %28 = vector.broadcast %27 : vector<8x1xf32> to vector<8x32xf32>
    %29 = arith.mulf %24, %28 : vector<8x32xf32>
    %30 = vector.broadcast %4 : vector<1x32xf32> to vector<8x32xf32>
    %31 = arith.mulf %29, %30 : vector<8x32xf32>
    %32 = vector.broadcast %5 : vector<1x32xf32> to vector<8x32xf32>
    %33 = arith.addf %31, %32 : vector<8x32xf32>
    %c0_15 = arith.constant 0 : index
    %c0_16 = arith.constant 0 : index
    %34 = vector.load %arg5[%c0_15, %c0_16] : memref<8x32xf32, #tpu.memory_space<vmem>>, vector<8x32xf32>
    tpu.vector_store %arg5[%c0_15, %c0_16], %33 {strides = array<i32>} : memref<8x32xf32, #tpu.memory_space<vmem>>, vector<8x32xf32>,
    return
  }
  func.func @transform_0(%arg0: i32) -> (i32, i32) {
    %c0_i32 = arith.constant 0 : i32
    %c0_i32_0 = arith.constant 0 : i32
    return %arg0, %c0_i32 : i32, i32
  }
  func.func @transform_1(%arg0: i32) -> (i32, i32) {
    %c0_i32 = arith.constant 0 : i32
    %c0_i32_0 = arith.constant 0 : i32
    return %arg0, %c0_i32 : i32, i32
  }
  func.func @transform_2(%arg0: i32) -> (i32, i32) {
    %c0_i32 = arith.constant 0 : i32
    %c0_i32_0 = arith.constant 0 : i32
    %c0_i32_1 = arith.constant 0 : i32
    return %c0_i32, %c0_i32_0 : i32, i32
  }
  func.func @transform_3(%arg0: i32) -> (i32, i32) {
    %c0_i32 = arith.constant 0 : i32
    %c0_i32_0 = arith.constant 0 : i32
    %c0_i32_1 = arith.constant 0 : i32
    return %c0_i32, %c0_i32_0 : i32, i32
  }
  func.func @transform_4(%arg0: i32) -> (i32, i32) {
    %c0_i32 = arith.constant 0 : i32
    %c0_i32_0 = arith.constant 0 : i32
    return %arg0, %c0_i32 : i32, i32
  }
}

</mosaic_0001>

<llo_original>
// kernel: tpu_custom_call.1
$region0: #{tpu_custom_call.1}
  #allocation0 [shape = 'u32[]', space=smem, size = 0x4, offset = 0x4, fixed_abs, tag = 'smem constant byte address 0x4 - core index']
  #allocation1 [shape = 'u32[72,128]{1,0:T(1,128)}', space=vmem, size = 0x9000, scoped, tag = 'internal scratch']
  %s0 = inlined_call_operand.hbm [shape: f32[16,32], index: 0, kind: input, shape index: {}]
  %s1 = inlined_call_operand.hbm [shape: f32[16,32], index: 1, kind: input, shape index: {}]
  %s2 = inlined_call_operand.hbm [shape: f32[32,32], index: 2, kind: input, shape index: {}]
  %s3 = inlined_call_operand.hbm [shape: f32[3,32], index: 3, kind: input, shape index: {}]
  %s4 = inlined_call_operand.hbm [shape: f32[16,32], index: 4, kind: output, shape index: {}]
  %s5 = sld [smem:[#allocation0]]
  $region65: #{tpu_custom_call.1} parent=0
    _
  %s7 = ssub.s32 1, %s5
  %s8 = scalar_select 0, %s7, %s5
  $region1: #{tpu_custom_call.1} parent=0
    #allocation2 [shape = 'u8[8192]{0}', space=vmem, size = 0x2000, scoped, tag = 'input window, operand 0']
    #allocation3 [shape = 's32[2]{0}', space=sflag, size = 0x8, scoped, tag = 'scoped memory for tpu_custom_call.1']
    #allocation4 [shape = 's32[2]{0}', space=sflag, size = 0x8, scoped, tag = 'scoped memory for tpu_custom_call.1']
    #allocation5 [shape = 'u8[8192]{0}', space=vmem, size = 0x2000, scoped, tag = 'input window, operand 1']
    #allocation6 [shape = 's32[2]{0}', space=sflag, size = 0x8, scoped, tag = 'scoped memory for tpu_custom_call.1']
    #allocation7 [shape = 'u8[16384]{0}', space=vmem, size = 0x4000, scoped, tag = 'input window, operand 2, single buffered']
    #allocation8 [shape = 'u8[2048]{0}', space=vmem, size = 0x800, scoped, tag = 'input window, operand 3, single buffered']
    #allocation9 [shape = 's32[1]{0}', space=sflag, size = 0x4, scoped, tag = 'scoped memory for tpu_custom_call.1']
    #allocation10 [shape = 'u8[8192]{0}', space=vmem, size = 0x2000, scoped, tag = 'output window, operand 0']
    %9 = vsyncpa [#allocation3], 0
    %s10 = scalar_lea.sflag [#allocation3], 1
    %11 = vsyncpa %s10, 0
    %12 = vsyncpa [#allocation6], 0
    %s13 = scalar_lea.sflag [#allocation6], 1
    %14 = vsyncpa %s13, 0
    %15 = vsyncpa [#allocation9], 0
    %16 = vsyncpa [#allocation4], 0
    %s17 = scalar_lea.sflag [#allocation4], 1
    %18 = vsyncpa %s17, 0
    loop: start=0, step=1, limit=4
    $region2: #{tpu_custom_call.1} parent=1 // loop_pre_header
      _
    $region3: #{tpu_custom_call.1} parent=1 // loop_header
      %s20 = sphi 0, %s24
      %p21 = scmp.ge.s32.totalorder %s20, 4
      %s30 = sphi 0, %s32
      %s33 = sphi 0, %s30
      %s34 = sphi 0, %s33
      %s50 = sphi 0, %s34
      %s56 = sphi 0, %s58
      %s59 = sphi 0, %s56
      %s60 = sphi 0, %s59
      %s76 = sphi 0, %s60
      %s80 = sphi 0, %s80
      %s82 = sphi 0, %s80
      %s83 = sphi 0, %s82
      %s97 = sphi 0, %s83
      %s101 = sphi 0, %s101
      %s103 = sphi 0, %s101
      %s104 = sphi 0, %s103
      %s118 = sphi 0, %s104
      %s124 = sphi 0, %s126
      %s127 = sphi 0, %s124
      %s128 = sphi 0, %s127
      %s144 = sphi 0, %s128
    $region4: #{tpu_custom_call.1} parent=1 // loop_header_branch
      %23 = sbr.rel (%p21) target = $region8
    $region5: #{tpu_custom_call.1} parent=1 // loop_body
      %s25 = ssub.s32 %s20, 1
      %s26 = ssub.s32 %s20, 2
      %s27 = sadd.s32 %s20, 1
      %s28 = ssub.s32 %s20, %s27
      %p29 = scmp.eq.s32.totalorder %s28, 0
      %s31 = sadd.s32 %s30, 1
      %s32 = scalar_select %p29, %s30, %s31
      %p35 = pneg %p29
      %p36 = scmp.eq.s32.totalorder %s20, 1
      %p37 = por %p35, %p36
      %p38 = scmp.ne.s32.totalorder %s30, %s33
      %p39 = scmp.eq.s32.totalorder %s20, 0
      %p40 = por %p38, %p39
      %p41 = scmp.ne.s32.totalorder %s30, %s33
      %p42 = scmp.eq.s32.totalorder %s25, 1
      %p43 = por %p41, %p42
      %p44 = scmp.ne.s32.totalorder %s33, %s34
      %p45 = scmp.eq.s32.totalorder %s25, 0
      %p46 = por %p44, %p45
      %p47 = scmp.ne.s32.totalorder %s33, %s34
      %p48 = scmp.eq.s32.totalorder %s26, 1
      %p49 = por %p47, %p48
      %p51 = scmp.ne.s32.totalorder %s34, %s50
      %p52 = scmp.eq.s32.totalorder %s26, 0
      %p53 = por %p51, %p52
      %s54 = ssub.s32 %s20, %s27
      %p55 = scmp.eq.s32.totalorder %s54, 0
      %s57 = sadd.s32 %s56, 1
      %s58 = scalar_select %p55, %s56, %s57
      %p61 = pneg %p55
      %p62 = scmp.eq.s32.totalorder %s20, 1
      %p63 = por %p61, %p62
      %p64 = scmp.ne.s32.totalorder %s56, %s59
      %p65 = scmp.eq.s32.totalorder %s20, 0
      %p66 = por %p64, %p65
      %p67 = scmp.ne.s32.totalorder %s56, %s59
      %p68 = scmp.eq.s32.totalorder %s25, 1
      %p69 = por %p67, %p68
      %p70 = scmp.ne.s32.totalorder %s59, %s60
      %p71 = scmp.eq.s32.totalorder %s25, 0
      %p72 = por %p70, %p71
      %p73 = scmp.ne.s32.totalorder %s59, %s60
      %p74 = scmp.eq.s32.totalorder %s26, 1
      %p75 = por %p73, %p74
      %p77 = scmp.ne.s32.totalorder %s60, %s76
      %p78 = scmp.eq.s32.totalorder %s26, 0
      %p79 = por %p77, %p78
      %s81 = sadd.s32 %s80, 1
      %p84 = scmp.eq.s32.totalorder %s20, 1
      %p85 = scmp.ne.s32.totalorder %s80, %s82
      %p86 = scmp.eq.s32.totalorder %s20, 0
      %p87 = por %p85, %p86
      %p88 = scmp.ne.s32.totalorder %s80, %s82
      %p89 = scmp.eq.s32.totalorder %s25, 1
      %p90 = por %p88, %p89
      %p91 = scmp.ne.s32.totalorder %s82, %s83
      %p92 = scmp.eq.s32.totalorder %s25, 0
      %p93 = por %p91, %p92
      %p94 = scmp.ne.s32.totalorder %s82, %s83
      %p95 = scmp.eq.s32.totalorder %s26, 1
      %p96 = por %p94, %p95
      %p98 = scmp.ne.s32.totalorder %s83, %s97
      %p99 = scmp.eq.s32.totalorder %s26, 0
      %p100 = por %p98, %p99
      %s102 = sadd.s32 %s101, 1
      %p105 = scmp.eq.s32.totalorder %s20, 1
      %p106 = scmp.ne.s32.totalorder %s101, %s103
      %p107 = scmp.eq.s32.totalorder %s20, 0
      %p108 = por %p106, %p107
      %p109 = scmp.ne.s32.totalorder %s101, %s103
      %p110 = scmp.eq.s32.totalorder %s25, 1
      %p111 = por %p109, %p110
      %p112 = scmp.ne.s32.totalorder %s103, %s104
      %p113 = scmp.eq.s32.totalorder %s25, 0
      %p114 = por %p112, %p113
      %p115 = scmp.ne.s32.totalorder %s103, %s104
      %p116 = scmp.eq.s32.totalorder %s26, 1
      %p117 = por %p115, %p116
      %p119 = scmp.ne.s32.totalorder %s104, %s118
      %p120 = scmp.eq.s32.totalorder %s26, 0
      %p121 = por %p119, %p120
      %s122 = ssub.s32 %s20, %s27
      %p123 = scmp.eq.s32.totalorder %s122, 0
      %s125 = sadd.s32 %s124, 1
      %s126 = scalar_select %p123, %s124, %s125
      %p129 = pneg %p123
      %p130 = scmp.eq.s32.totalorder %s20, 1
      %p131 = por %p129, %p130
      %p132 = scmp.ne.s32.totalorder %s124, %s127
      %p133 = scmp.eq.s32.totalorder %s20, 0
      %p134 = por %p132, %p133
      %p135 = scmp.ne.s32.totalorder %s124, %s127
      %p136 = scmp.eq.s32.totalorder %s25, 1
      %p137 = por %p135, %p136
      %p138 = scmp.ne.s32.totalorder %s127, %s128
      %p139 = scmp.eq.s32.totalorder %s25, 0
      %p140 = por %p138, %p139
      %p141 = scmp.ne.s32.totalorder %s127, %s128
      %p142 = scmp.eq.s32.totalorder %s26, 1
      %p143 = por %p141, %p142
      %p145 = scmp.ne.s32.totalorder %s128, %s144
      %p146 = scmp.eq.s32.totalorder %s26, 0
      %p147 = por %p145, %p146
      %p148 = scmp.le.s32.totalorder 1, %s20
      %p149 = scmp.lt.s32.totalorder %s20, 3
      %p150 = pnand %p148, %p149
      %p151 = pneg %p150
      // Predicated region
      $region9: #{tpu_custom_call.1} parent=5 // pred_check
        _
      $region10: #{tpu_custom_call.1} parent=5 // pred_check_branch
        %153 = sbr.rel (%p150) target = $region12
      $region11: #{tpu_custom_call.1} parent=5 // pred_region
        %s154 = ssub.s32 %s20, 1
        // Predicated region
        $region13: #{tpu_custom_call.1} parent=11 // pred_check
          %p155 = pneg %p93
        $region14: #{tpu_custom_call.1} parent=11 // pred_check_branch
          %157 = sbr.rel (%p155) target = $region16
        $region15: #{tpu_custom_call.1} parent=11 // pred_region
          %159 = vsyncadd [#allocation6], 0
          %s160 = sshll.u32 %s2, 4
          %s161 = int_to_ptr.hbm [resolvable:$true] %s160
          %s162 = sshll.u32 [#allocation7], 4
          %s163 = int_to_ptr.vmem [resolvable:$true] %s162
          %168 = dma.hbm_to_vmem [thread:$0]  %s161, 512, %s163, [#allocation6], 128, 128, 8
        $region16: #{tpu_custom_call.1} parent=11 // pred_fallthru
          _
        // Predicated region
        $region17: #{tpu_custom_call.1} parent=11 // pred_check
          %p169 = pneg %p114
        $region18: #{tpu_custom_call.1} parent=11 // pred_check_branch
          %171 = sbr.rel (%p169) target = $region20
        $region19: #{tpu_custom_call.1} parent=11 // pred_region
          %173 = vsyncadd [#allocation9], 0
          %s175 = sshll.u32 %s3, 4
          %s176 = int_to_ptr.hbm [resolvable:$true] %s175
          %s177 = sshll.u32 [#allocation8], 4
          %s178 = int_to_ptr.vmem [resolvable:$true] %s177
          %180 = dma.hbm_to_vmem [thread:$0]  %s176, 64, %s178, [#allocation9]
        $region20: #{tpu_custom_call.1} parent=11 // pred_fallthru
          _
      $region12: #{tpu_custom_call.1} parent=5 // pred_fallthru
        _
      %p181 = scmp.lt.s32.totalorder %s20, 2
      // Predicated region
      $region21: #{tpu_custom_call.1} parent=5 // pred_check
        %p182 = pneg %p181
      $region22: #{tpu_custom_call.1} parent=5 // pred_check_branch
        %184 = sbr.rel (%p182) target = $region24
      $region23: #{tpu_custom_call.1} parent=5 // pred_region
        // Predicated region
        $region25: #{tpu_custom_call.1} parent=23 // pred_check
          %p185 = pneg %p40
        $region26: #{tpu_custom_call.1} parent=23 // pred_check_branch
          %187 = sbr.rel (%p185) target = $region28
        $region27: #{tpu_custom_call.1} parent=23 // pred_region
          %s188 = sand.u32 %s30, 1
          %s189 = scalar_lea.sflag [#allocation3], %s188
          %s190 = sand.u32 %s30, 1
          %s191 = smul.addr %s190, 8
          %s192 = scalar_lea.vmem [#allocation2], %s191
          %194 = vsyncadd %s189, 0
          %s195 = smul.addr %s20, 8
          %s196 = scalar_lea.hbm %s0, %s195
          %s198 = sshll.u32 %s196, 4
          %s199 = int_to_ptr.hbm [resolvable:$true] %s198
          %s200 = sshll.u32 %s192, 4
          %s201 = int_to_ptr.vmem [resolvable:$true] %s200
          %203 = dma.hbm_to_vmem [thread:$0]  %s199, 128, %s201, %s189
        $region28: #{tpu_custom_call.1} parent=23 // pred_fallthru
          _
        // Predicated region
        $region29: #{tpu_custom_call.1} parent=23 // pred_check
          %p204 = pneg %p66
        $region30: #{tpu_custom_call.1} parent=23 // pred_check_branch
          %206 = sbr.rel (%p204) target = $region32
        $region31: #{tpu_custom_call.1} parent=23 // pred_region
          %s207 = sand.u32 %s20, 1
          %s208 = scalar_lea.sflag [#allocation6], %s207
          %s209 = sand.u32 %s56, 1
          %s210 = smul.addr %s209, 8
          %s211 = scalar_lea.vmem [#allocation5], %s210
          %213 = vsyncadd %s208, 0
          %s214 = smul.addr %s20, 8
          %s215 = scalar_lea.hbm %s1, %s214
          %s217 = sshll.u32 %s215, 4
          %s218 = int_to_ptr.hbm [resolvable:$true] %s217
          %s219 = sshll.u32 %s211, 4
          %s220 = int_to_ptr.vmem [resolvable:$true] %s219
          %222 = dma.hbm_to_vmem [thread:$0]  %s218, 128, %s220, %s208
        $region32: #{tpu_custom_call.1} parent=23 // pred_fallthru
          _
      $region24: #{tpu_custom_call.1} parent=5 // pred_fallthru
        _
      %p223 = scmp.le.s32.totalorder 1, %s20
      %p224 = scmp.lt.s32.totalorder %s20, 3
      %p225 = pnand %p223, %p224
      %p226 = pneg %p225
      // Predicated region
      $region33: #{tpu_custom_call.1} parent=5 // pred_check
        _
      $region34: #{tpu_custom_call.1} parent=5 // pred_check_branch
        %228 = sbr.rel (%p225) target = $region36
      $region35: #{tpu_custom_call.1} parent=5 // pred_region
        %s229 = ssub.s32 %s20, 1
        %s230 = sand.u32 %s33, 1
        %s231 = scalar_lea.sflag [#allocation3], %s230
        %s232 = sand.u32 %s33, 1
        %s233 = smul.addr %s232, 8
        %s234 = scalar_lea.vmem [#allocation2], %s233
        // Predicated region
        $region37: #{tpu_custom_call.1} parent=35 // pred_check
          %p235 = pneg %p46
        $region38: #{tpu_custom_call.1} parent=35 // pred_check_branch
          %237 = sbr.rel (%p235) target = $region40
        $region39: #{tpu_custom_call.1} parent=35 // pred_region
          %239 = dma.done %s231, 128
        $region40: #{tpu_custom_call.1} parent=35 // pred_fallthru
          _
        %s240 = sand.u32 %s25, 1
        %s241 = scalar_lea.sflag [#allocation6], %s240
        %s242 = sand.u32 %s59, 1
        %s243 = smul.addr %s242, 8
        %s244 = scalar_lea.vmem [#allocation5], %s243
        // Predicated region
        $region41: #{tpu_custom_call.1} parent=35 // pred_check
          %p245 = pneg %p72
        $region42: #{tpu_custom_call.1} parent=35 // pred_check_branch
          %247 = sbr.rel (%p245) target = $region44
        $region43: #{tpu_custom_call.1} parent=35 // pred_region
          %249 = dma.done %s241, 128
        $region44: #{tpu_custom_call.1} parent=35 // pred_fallthru
          _
        // Predicated region
        $region45: #{tpu_custom_call.1} parent=35 // pred_check
          %p250 = pneg %p93
        $region46: #{tpu_custom_call.1} parent=35 // pred_check_branch
          %252 = sbr.rel (%p250) target = $region48
        $region47: #{tpu_custom_call.1} parent=35 // pred_region
          %254 = dma.done [#allocation6], 512
        $region48: #{tpu_custom_call.1} parent=35 // pred_fallthru
          _
        // Predicated region
        $region49: #{tpu_custom_call.1} parent=35 // pred_check
          %p255 = pneg %p114
        $region50: #{tpu_custom_call.1} parent=35 // pred_check_branch
          %257 = sbr.rel (%p255) target = $region52
        $region51: #{tpu_custom_call.1} parent=35 // pred_region
          %259 = dma.done [#allocation9], 64
        $region52: #{tpu_custom_call.1} parent=35 // pred_fallthru
          _
        %s260 = sand.u32 %s33, 1
        %s261 = scalar_lea.sflag [#allocation3], %s260
        %s262 = sand.u32 %s33, 1
        %s263 = smul.addr %s262, 8
        %s264 = scalar_lea.vmem [#allocation2], %s263
        %p265 = pneg %p46
        %p266 = pneg %p43
        %s267 = sand.u32 %s25, 1
        %s268 = scalar_lea.sflag [#allocation6], %s267
        %s269 = sand.u32 %s59, 1
        %s270 = smul.addr %s269, 8
        %s271 = scalar_lea.vmem [#allocation5], %s270
        %p272 = pneg %p72
        %p273 = pneg %p69
        %p274 = pneg %p93
        %p275 = pneg %p90
        %p276 = pneg %p114
        %p277 = pneg %p111
        %p278 = pneg %p140
        %p279 = pneg %p137
        %s280 = sand.u32 %s127, 1
        %s281 = scalar_lea.sflag [#allocation4], %s280
        %s282 = sand.u32 %s127, 1
        %s283 = smul.addr %s282, 8
        %s284 = scalar_lea.vmem [#allocation10], %s283
        %v285 = vld [vmem:[%s234] sm:$0xff]
        %v286 = vld [vmem:[#allocation7] sm:$0xff]
        %v287 = vld [vmem:[#allocation7 + $0x8] sm:$0xff]
        %v288 = vld [vmem:[#allocation7 + $0x10] sm:$0xff]
        %v289 = vld [vmem:[#allocation7 + $0x18] sm:$0xff]
        %v290 = vld [vmem:[#allocation8] sm:$0x1]
        %v291 = vld [vmem:[#allocation8 + $0x1] sm:$0x1]
        %v292 = vld [vmem:[#allocation8 + $0x2] sm:$0x1]
        %v293 = vperm.slane %v290, 0
        %vm294 = vcmask 261120
        %v296 = vsel %vm294, %v285, 0
        %298 = vmatpush.msra.mxu0 0.0
        %299 = vmatpush.msra.mxu0 0.0
        %300 = vmatpush.msra.mxu0 0.0
        %301 = vmatpush.msra.mxu0 0.0
        %302 = vmatpush.msra.mxu0 0.0
        %303 = vmatpush.msra.mxu0 0.0
        %304 = vmatpush.msra.mxu0 0.0
        %305 = vmatpush.msra.mxu0 0.0
        %306 = vmatpush.msra.mxu0 0.0
        %307 = vmatpush.msra.mxu0 0.0
        %308 = vmatpush.msra.mxu0 0.0
        %309 = vmatpush.msra.mxu0 0.0
        %310 = vmatpush.msra.mxu0 %v289
        %311 = vmatpush.msra.mxu0 %v288
        %312 = vmatpush.msra.mxu0 %v287
        %313 = vmatpush.msra.mxu0 %v286
        %314 = vmatmul.f32.gmra.mxu0 %v296
        %v315 = vpop.f32.mrf.mxu0
        %v316 = vadd.f32 %v293, %v315
        %317 = vdwg.mxu0
        %v318 = vld [vmem:[%s244] sm:$0xff]
        %v319 = vadd.f32 %v316, %v318
        %v320 = vsel %vm294, %v319, 0.0
        %321 = vadd.xlane.f32.xlu0 %v320
        %v322 = vpop.xlane.xlu0 %321
        %v323 = vmul.f32 %v319, %v319
        %v324 = vsel %vm294, %v323, 0.0
        %325 = vadd.xlane.f32.xlu0 %v324
        %v326 = vpop.xlane.xlu0 %325
        %v327 = vmul.f32 %v322, 0.03125
        %v328 = vmul.f32 %v326, 0.03125
        %v329 = vmul.f32 %v327, %v327
        %v330 = vsub.f32 %v328, %v329
        %v331 = vmax.f32 %v330, 0.0
        %v332 = vsub.f32 %v319, %v327
        %v333 = vadd.f32 %v331, 1e-12
        %v334 = vrsqrt.pop %v333
        %v335 = vmul.f32 %v334, %v333
        %v336 = vmul.f32 %v335, %v334
        %v337 = vmul.f32 0.5, %v336
        %v338 = vsub.f32 1.5, %v337
        %v339 = vmul.f32 %v334, %v338
        %vm340 = vweird.f32 %v333
        %vm341 = vweird.f32 %v334
        %vm342 = vmor %vm340, %vm341
        %v343 = vsel %vm342, %v334, %v339
        %v344 = vmul.f32 %v332, %v343
        %v345 = vperm.slane %v291, 0
        %v346 = vmul.f32 %v344, %v345
        %v347 = vperm.slane %v292, 0
        %v348 = vadd.f32 %v346, %v347
        %349 = vst.msk [vmem:[%s284] sm:$0xff] %vm294, %v348
        %s350 = sand.u32 %s127, 1
        %s351 = scalar_lea.sflag [#allocation4], %s350
        %s352 = sand.u32 %s127, 1
        %s353 = smul.addr %s352, 8
        %s354 = scalar_lea.vmem [#allocation10], %s353
        // Predicated region
        $region53: #{tpu_custom_call.1} parent=35 // pred_check
          %p355 = pneg %p137
        $region54: #{tpu_custom_call.1} parent=35 // pred_check_branch
          %357 = sbr.rel (%p355) target = $region56
        $region55: #{tpu_custom_call.1} parent=35 // pred_region
          %359 = vsyncadd %s351, 0
          %s360 = smul.addr %s25, 8
          %s361 = scalar_lea.hbm %s4, %s360
          %s363 = sshll.u32 %s354, 4
          %s364 = int_to_ptr.vmem [resolvable:$true] %s363
          %s365 = sshll.u32 %s361, 4
          %s366 = int_to_ptr.hbm [resolvable:$true] %s365
          %368 = dma.vmem_to_hbm [thread:$0]  %s364, 128, %s366, %s351
        $region56: #{tpu_custom_call.1} parent=35 // pred_fallthru
          _
      $region36: #{tpu_custom_call.1} parent=5 // pred_fallthru
        _
      %p369 = scmp.le.s32.totalorder 2, %s20
      // Predicated region
      $region57: #{tpu_custom_call.1} parent=5 // pred_check
        %p370 = pneg %p369
      $region58: #{tpu_custom_call.1} parent=5 // pred_check_branch
        %372 = sbr.rel (%p370) target = $region60
      $region59: #{tpu_custom_call.1} parent=5 // pred_region
        %s373 = ssub.s32 %s20, 2
        // Predicated region
        $region61: #{tpu_custom_call.1} parent=59 // pred_check
          %p374 = pneg %p143
        $region62: #{tpu_custom_call.1} parent=59 // pred_check_branch
          %376 = sbr.rel (%p374) target = $region64
        $region63: #{tpu_custom_call.1} parent=59 // pred_region
          %s377 = sand.u32 %s128, 1
          %s378 = scalar_lea.sflag [#allocation4], %s377
          %s379 = sand.u32 %s128, 1
          %s380 = smul.addr %s379, 8
          %s381 = scalar_lea.vmem [#allocation10], %s380
          %383 = dma.done %s378, 128
        $region64: #{tpu_custom_call.1} parent=59 // pred_fallthru
          _
      $region60: #{tpu_custom_call.1} parent=5 // pred_fallthru
        _
    $region6: #{tpu_custom_call.1} parent=1 // loop_footer
      %s24 = sadd.s32 1, %s20
    $region7: #{tpu_custom_call.1} parent=1 // loop_footer_branch
      %19 = sbr.rel target = $region3
    $region8: #{tpu_custom_call.1} parent=1 // loop_exit
      _
    %384 = vsyncpa [#allocation3], 1
    %s385 = scalar_lea.sflag [#allocation3], 1
    %386 = vsyncpa %s385, 1
    %387 = vsyncpa [#allocation6], 1
    %s388 = scalar_lea.sflag [#allocation6], 1
    %389 = vsyncpa %s388, 1
    %390 = vsyncpa [#allocation9], 1
    %391 = vsyncpa [#allocation4], 1
    %s392 = scalar_lea.sflag [#allocation4], 1
    %393 = vsyncpa %s392, 1

</llo_original>
